<compile_context>
chip_gen: v7x
topology: tpu7x:2x2x1
jax: 0.10.0
libtpu: 0.0.40
codegen_flags: <defaults>
</compile_context>

<pallas_src>
import jax
import jax.numpy as jnp
from jax.experimental import pallas as pl
from jax.experimental.pallas import tpu as pltpu

V_THRESHOLD = 1.0
V_RESET = 0.0  # not None -> hard reset

LANES = 1024             # lane-dense last dim (multiple of 128 -> unmasked vst)
MAX_BLOCK_ROWS = 512     # (512, 1024) f32 block = 2 MiB per stream per buffer
VMEM_LIMIT_BYTES = 48 << 20  # >= 16 MiB of block buffers; <= v7x 64 MiB physical


def _base_node_scalar_v_kernel(v0_ref, dv_ref, spike_ref, v_next_ref):
    """Membrane state is a single scalar held in SMEM (no HBM read stream)."""
    v_charged = dv_ref[...] + v0_ref[0]
    fired = v_charged >= V_THRESHOLD
    spike_ref[...] = fired.astype(spike_ref.dtype)
    v_next_ref[...] = jnp.where(fired, V_RESET, v_charged).astype(v_next_ref.dtype)


def _base_node_array_v_kernel(v_ref, dv_ref, spike_ref, v_next_ref):
    """Membrane state is a full tensor (recurrent update)."""
    v_charged = v_ref[...] + dv_ref[...]
    fired = v_charged >= V_THRESHOLD
    spike_ref[...] = fired.astype(spike_ref.dtype)
    v_next_ref[...] = jnp.where(fired, V_RESET, v_charged).astype(v_next_ref.dtype)


def base_node_forward(dv, v_state, spike_dtype=None):
    """dv:        (N, C, H, W) float32 input voltage increment.
    v_state:      scalar float or (N, C, H, W) membrane potential.
    spike_dtype:  optional narrower dtype for the spike output (e.g. bf16;
                  spikes are exactly 0/1 so bf16 is bit-exact for masking).
    Returns (spike, v_next); v_next is shaped/typed like dv, spike is shaped
    like dv with dtype spike_dtype (default: dv.dtype)."""
    shape = dv.shape
    dtype = dv.dtype
    if spike_dtype is None:
        spike_dtype = dtype
    total = dv.size

    # Lane-dense 2-D slab. Pad only when the element count is not a multiple
    # of LANES (the ragged last *row-block* is handled by Pallas masking, so
    # we do NOT round rows up to a block multiple).
    pad = (-total) % LANES
    rows = (total + pad) // LANES
    block_rows = min(MAX_BLOCK_ROWS, rows)   # multiple of 8, or == full rows
    num_blocks = pl.cdiv(rows, block_rows)

    dv_flat = dv.reshape(-1)
    if pad:
        dv_flat = jnp.pad(dv_flat, (0, pad))
    dv2d = dv_flat.reshape(rows, LANES)

    block_spec = pl.BlockSpec((block_rows, LANES), lambda i: (i, 0))
    out_shape = (
        jax.ShapeDtypeStruct((rows, LANES), spike_dtype),
        jax.ShapeDtypeStruct((rows, LANES), dtype),
    )
    out_specs = (block_spec, block_spec)
    compiler_params = pltpu.CompilerParams(
        dimension_semantics=("parallel",),
        vmem_limit_bytes=VMEM_LIMIT_BYTES,
    )

    elem = jnp.dtype(dtype).itemsize
    spike_bytes = jnp.dtype(spike_dtype).itemsize
    n_padded = rows * LANES

    if jnp.ndim(v_state) == 0:
        # Scalar initial state: pass via SMEM, broadcast in-kernel.
        v0 = jnp.asarray(v_state, dtype=dtype).reshape(1)
        spike2d, vnext2d = pl.pallas_call(
            _base_node_scalar_v_kernel,
            out_shape=out_shape,
            grid=(num_blocks,),
            in_specs=[
                pl.BlockSpec(memory_space=pltpu.MemorySpace.SMEM),  # v0 scalar
                block_spec,                                         # dv
            ],
            out_specs=out_specs,
            compiler_params=compiler_params,
            cost_estimate=pl.CostEstimate(
                flops=3 * n_padded,
                transcendentals=0,
                # 1 read stream + v_next write + spike write
                bytes_accessed=(2 * elem + spike_bytes) * n_padded,
            ),
        )(v0, dv2d)
    else:
        v_flat = v_state.astype(dtype).reshape(-1)
        if pad:
            v_flat = jnp.pad(v_flat, (0, pad))
        v2d = v_flat.reshape(rows, LANES)
        spike2d, vnext2d = pl.pallas_call(
            _base_node_array_v_kernel,
            out_shape=out_shape,
            grid=(num_blocks,),
            in_specs=[block_spec, block_spec],      # v, dv
            out_specs=out_specs,
            compiler_params=compiler_params,
            cost_estimate=pl.CostEstimate(
                flops=3 * n_padded,
                transcendentals=0,
                # 2 read streams + v_next write + spike write
                bytes_accessed=(3 * elem + spike_bytes) * n_padded,
            ),
        )(v2d, dv2d)

    if pad:
        spike = spike2d.reshape(-1)[:total].reshape(shape)
        v_next = vnext2d.reshape(-1)[:total].reshape(shape)
    else:
        spike = spike2d.reshape(shape)
        v_next = vnext2d.reshape(shape)
    return spike, v_next


if __name__ == "__main__":
    key = jax.random.PRNGKey(0)
    N, C, H, W = 2, 4, 16, 16
    dv = jax.random.uniform(
        key, (N, C, H, W), dtype=jnp.float32, minval=0.0, maxval=2.0
    )

    # Initial state: v = v_reset (BaseNode.__init__ with v_reset=0.0).
    v0 = jnp.float32(V_RESET)

    # Step 1: scalar-state path. Step 2: full-array recurrent state path.
    spike1, v1 = base_node_forward(dv, v0)
    spike2, v2 = base_node_forward(dv, v1)
    jax.block_until_ready((spike1, v1, spike2, v2))

    # Pure-JAX reference.
    def ref_step(v, dv_):
        vc = v + dv_
        fired = vc >= V_THRESHOLD
        return fired.astype(dv_.dtype), jnp.where(fired, V_RESET, vc)

    s1_ref, v1_ref = ref_step(jnp.zeros_like(dv) + v0, dv)
    s2_ref, v2_ref = ref_step(v1_ref, dv)

    assert spike1.shape == dv.shape and v1.shape == dv.shape
    assert jnp.array_equal(spike1, s1_ref), "spike (step 1) mismatch"
    assert jnp.allclose(v1, v1_ref), "v_next (step 1) mismatch"
    assert jnp.array_equal(spike2, s2_ref), "spike (step 2) mismatch"
    assert jnp.allclose(v2, v2_ref), "v_next (step 2) mismatch"

    print("KERNEL_OK")
</pallas_src>

<mosaic_0001>
module attributes {stable_mosaic.version = 11 : i64} {
  func.func @_base_node_scalar_v_kernel(%arg0: i32, %arg1: memref<1xf32, #tpu.memory_space<smem>>, %arg2: memref<2x1024xf32, #tpu.memory_space<vmem>>, %arg3: memref<2x1024xf32, #tpu.memory_space<vmem>>, %arg4: memref<2x1024xf32, #tpu.memory_space<vmem>>) attributes {dimension_semantics = [#tpu.dimension_semantics<parallel>], iteration_bounds = array<i64: 1>, scalar_prefetch = 0 : i64, scratch_operands = 0 : i64, tpu.core_type = #tpu.core_type<tc>, window_params = [{transform_indices = @transform_0, window_bounds = array<i64: 1>}, {transform_indices = @transform_1, window_bounds = array<i64: 2, 1024>}, {transform_indices = @transform_2, window_bounds = array<i64: 2, 1024>}, {transform_indices = @transform_3, window_bounds = array<i64: 2, 1024>}]} {
    %c0 = arith.constant 0 : index
    %c0_0 = arith.constant 0 : index
    %0 = vector.load %arg2[%c0, %c0_0] : memref<2x1024xf32, #tpu.memory_space<vmem>>, vector<2x1024xf32>
    %c0_1 = arith.constant 0 : index
    %1 = memref.load %arg1[%c0_1] : memref<1xf32, #tpu.memory_space<smem>>
    %2 = vector.broadcast %1 : f32 to vector<2x1024xf32>
    %3 = arith.addf %0, %2 : vector<2x1024xf32>
    %cst = arith.constant 1.000000e+00 : f32
    %4 = vector.broadcast %cst : f32 to vector<2x1024xf32>
    %5 = arith.cmpf oge, %3, %4 : vector<2x1024xf32>
    %6 = arith.extui %5 : vector<2x1024xi1> to vector<2x1024xi32>
    %7 = arith.sitofp %6 : vector<2x1024xi32> to vector<2x1024xf32>
    %c0_2 = arith.constant 0 : index
    %c0_3 = arith.constant 0 : index
    %8 = vector.load %arg3[%c0_2, %c0_3] : memref<2x1024xf32, #tpu.memory_space<vmem>>, vector<2x1024xf32>
    tpu.vector_store %arg3[%c0_2, %c0_3], %7 {strides = array<i32>} : memref<2x1024xf32, #tpu.memory_space<vmem>>, vector<2x1024xf32>,
    %cst_4 = arith.constant 0.000000e+00 : f32
    %9 = vector.broadcast %cst_4 : f32 to vector<2x1024xf32>
    %10 = arith.select %5, %9, %3 : vector<2x1024xi1>, vector<2x1024xf32>
    %c0_5 = arith.constant 0 : index
    %c0_6 = arith.constant 0 : index
    %11 = vector.load %arg4[%c0_5, %c0_6] : memref<2x1024xf32, #tpu.memory_space<vmem>>, vector<2x1024xf32>
    tpu.vector_store %arg4[%c0_5, %c0_6], %10 {strides = array<i32>} : memref<2x1024xf32, #tpu.memory_space<vmem>>, vector<2x1024xf32>,
    return
  }
  func.func @transform_0(%arg0: i32) -> i32 {
    %c0_i32 = arith.constant 0 : i32
    %c0_i32_0 = arith.constant 0 : i32
    return %c0_i32 : i32
  }
  func.func @transform_1(%arg0: i32) -> (i32, i32) {
    %c0_i32 = arith.constant 0 : i32
    %c0_i32_0 = arith.constant 0 : i32
    return %arg0, %c0_i32 : i32, i32
  }
  func.func @transform_2(%arg0: i32) -> (i32, i32) {
    %c0_i32 = arith.constant 0 : i32
    %c0_i32_0 = arith.constant 0 : i32
    return %arg0, %c0_i32 : i32, i32
  }
  func.func @transform_3(%arg0: i32) -> (i32, i32) {
    %c0_i32 = arith.constant 0 : i32
    %c0_i32_0 = arith.constant 0 : i32
    return %arg0, %c0_i32 : i32, i32
  }
}

</mosaic_0001>

<llo_original>
// kernel: tpu_custom_call.1
$region0: #{tpu_custom_call.1}
  #allocation0 [shape = 'u32[]', space=smem, size = 0x4, offset = 0x4, fixed_abs, tag = 'smem constant byte address 0x4 - core index']
  #allocation1 [shape = 'u32[144,128]{1,0:T(1,128)}', space=vmem, size = 0x12000, scoped, tag = 'internal scratch']
  #allocation2 [shape = 'f32[1]{0:T(128)S(6)}', space=smem, size = 0x200, scoped, tag = 'scoped memory for tpu_custom_call.1']
  %s0 = inlined_call_operand.<no memory space> [shape: f32[1], index: 0, kind: input, shape index: {}]
  %s1 = inlined_call_operand.hbm [shape: f32[2,1024], index: 1, kind: input, shape index: {}]
  %s2 = inlined_call_operand.hbm [shape: f32[2,1024], index: 2, kind: output, shape index: {0}]
  %s3 = inlined_call_operand.hbm [shape: f32[2,1024], index: 3, kind: output, shape index: {1}]
  %4 = xla_tuple %s2, %s3
  %s5 = sld [smem:[#allocation0]]
  $region30: #{tpu_custom_call.1} parent=0
    _
  %s7 = ssub.s32 1, %s5
  %s8 = scalar_select 0, %s7, %s5
  %9 = sst [smem:[#allocation2]] %s0
  $region1: #{tpu_custom_call.1} parent=0
    #allocation3 [shape = 'u8[8192]{0}', space=vmem, size = 0x2000, scoped, tag = 'input window, operand 1, single buffered']
    #allocation4 [shape = 's32[1]{0}', space=sflag, size = 0x4, scoped, tag = 'scoped memory for tpu_custom_call.1']
    #allocation5 [shape = 's32[1]{0}', space=sflag, size = 0x4, scoped, tag = 'scoped memory for tpu_custom_call.1']
    #allocation6 [shape = 'u8[8192]{0}', space=vmem, size = 0x2000, scoped, tag = 'output window, operand 0, single buffered']
    #allocation7 [shape = 'u8[8192]{0}', space=vmem, size = 0x2000, scoped, tag = 'output window, operand 1, single buffered']
    #allocation8 [shape = 's32[1]{0}', space=sflag, size = 0x4, scoped, tag = 'scoped memory for tpu_custom_call.1']
    %10 = vsyncpa [#allocation4], 0
    %11 = vsyncpa [#allocation5], 0
    %12 = vsyncpa [#allocation8], 0
    // Predicated region
    $region2: #{tpu_custom_call.1} parent=1 // pred_check
      _
    $region3: #{tpu_custom_call.1} parent=1 // pred_check_branch
      %14 = sbr.rel (0) target = $region5
    $region4: #{tpu_custom_call.1} parent=1 // pred_region
      _
    $region5: #{tpu_custom_call.1} parent=1 // pred_fallthru
      _
    // Predicated region
    $region6: #{tpu_custom_call.1} parent=1 // pred_check
      _
    $region7: #{tpu_custom_call.1} parent=1 // pred_check_branch
      %16 = sbr.rel (0) target = $region9
    $region8: #{tpu_custom_call.1} parent=1 // pred_region
      %s18 = ssub.s32 256, 256
      %19 = vsyncadd [#allocation4], %s18
      %s21 = sshll.u32 [#allocation3], 4
      %s22 = int_to_ptr.vmem [resolvable:$true] %s21
      %24 = dma.hbm_to_vmem [thread:$0]  %s1, 256, %s22, [#allocation4]
    $region9: #{tpu_custom_call.1} parent=1 // pred_fallthru
      _
    // Predicated region
    $region10: #{tpu_custom_call.1} parent=1 // pred_check
      _
    $region11: #{tpu_custom_call.1} parent=1 // pred_check_branch
      %26 = sbr.rel (0) target = $region13
    $region12: #{tpu_custom_call.1} parent=1 // pred_region
      %27 = dma.done [#allocation4], 256
    $region13: #{tpu_custom_call.1} parent=1 // pred_fallthru
      _
    %v28 = vld [vmem:[#allocation3] sm:$0xff]
    %v29 = vld [vmem:[#allocation3 + $0x8] sm:$0xff]
    %s30 = sld [smem:[#allocation2]]
    %v31 = vstv %s30
    %v32 = vadd.f32 %v28, %v31
    %v33 = vadd.f32 %v29, %v31
    %vm34 = vcmp.ge.f32.partialorder %v32, 1.0
    %vm35 = vcmp.ge.f32.partialorder %v33, 1.0
    %v36 = vsel %vm34, 1, 0
    %v37 = vsel %vm35, 1, 0
    %v38 = vcvt.s32.f32 %v36
    %v39 = vcvt.s32.f32 %v37
    %40 = vst [vmem:[#allocation6] sm:$0xff] %v38
    %41 = vst [vmem:[#allocation6 + $0x8] sm:$0xff] %v39
    %v42 = vsel %vm34, 0.0, %v32
    %v43 = vsel %vm35, 0.0, %v33
    %44 = vst [vmem:[#allocation7] sm:$0xff] %v42
    %45 = vst [vmem:[#allocation7 + $0x8] sm:$0xff] %v43
    // Predicated region
    $region14: #{tpu_custom_call.1} parent=1 // pred_check
      _
    $region15: #{tpu_custom_call.1} parent=1 // pred_check_branch
      %47 = sbr.rel (0) target = $region17
    $region16: #{tpu_custom_call.1} parent=1 // pred_region
      %s49 = ssub.s32 256, 256
      %50 = vsyncadd [#allocation5], %s49
      %s52 = sshll.u32 [#allocation6], 4
      %s53 = int_to_ptr.vmem [resolvable:$true] %s52
      %55 = dma.vmem_to_hbm [thread:$0]  %s53, 256, %s2, [#allocation5]
    $region17: #{tpu_custom_call.1} parent=1 // pred_fallthru
      _
    // Predicated region
    $region18: #{tpu_custom_call.1} parent=1 // pred_check
      _
    $region19: #{tpu_custom_call.1} parent=1 // pred_check_branch
      %57 = sbr.rel (0) target = $region21
    $region20: #{tpu_custom_call.1} parent=1 // pred_region
      %s59 = ssub.s32 256, 256
      %60 = vsyncadd [#allocation8], %s59
      %s62 = sshll.u32 [#allocation7], 4
      %s63 = int_to_ptr.vmem [resolvable:$true] %s62
      %65 = dma.vmem_to_hbm [thread:$0]  %s63, 256, %s3, [#allocation8]
    $region21: #{tpu_custom_call.1} parent=1 // pred_fallthru
      _
    // Predicated region
    $region22: #{tpu_custom_call.1} parent=1 // pred_check
      _
    $region23: #{tpu_custom_call.1} parent=1 // pred_check_branch
      %67 = sbr.rel (0) target = $region25
    $region24: #{tpu_custom_call.1} parent=1 // pred_region
      %68 = dma.done [#allocation5], 256
    $region25: #{tpu_custom_call.1} parent=1 // pred_fallthru
      _
    // Predicated region
    $region26: #{tpu_custom_call.1} parent=1 // pred_check
      _
    $region27: #{tpu_custom_call.1} parent=1 // pred_check_branch
      %70 = sbr.rel (0) target = $region29
    $region28: #{tpu_custom_call.1} parent=1 // pred_region
      %71 = dma.done [#allocation8], 256
    $region29: #{tpu_custom_call.1} parent=1 // pred_fallthru
      _
    %72 = vsyncpa [#allocation4], 1
    %73 = vsyncpa [#allocation5], 1
    %74 = vsyncpa [#allocation8], 1

</llo_original>
